<compile_context>
chip_gen: v5e
topology: v5e:2x2
jax: 0.10.0
libtpu: 0.0.40
codegen_flags: <defaults>
</compile_context>

<pallas_src>
import functools

import jax
import jax.numpy as jnp
from jax.experimental import pallas as pl
from jax.experimental.pallas import tpu as pltpu

_LANES = 128
_TARGET_BLOCK_BYTES = 2 * 1024 * 1024   # ~2 MiB per input per grid step
_BIG_CHUNK_ROWS = 64                    # inner-loop chunk for large tiles
_SPLIT_MIN_ROWS = 1024                  # only use 2 grid splits above ~0.5 MiB


def _round_up(x: int, m: int) -> int:
    return (x + m - 1) // m * m


def _cdiv(a: int, b: int) -> int:
    return (a + b - 1) // b


def _nse_kernel(pivot_ref, pred_ref, tgt_ref, part_ref,
                sum_t_ref, sum_t2_ref, ss_res_ref,
                *, n_chunks: int, chunk_rows: int):
    """Accumulate shifted moments of one (tile_r, 128) tile.

    Grid = (splits, tiles_per_split).  The inner axis streams this split's row
    range; partial moments are collapsed to 3 scalars on the last inner step
    and written to this split's row of the SMEM output.
    """
    i = pl.program_id(1)

    @pl.when(i == 0)
    def _init():
        sum_t_ref[...] = jnp.zeros_like(sum_t_ref)
        sum_t2_ref[...] = jnp.zeros_like(sum_t2_ref)
        ss_res_ref[...] = jnp.zeros_like(ss_res_ref)

    pivot = pivot_ref[0]  # f32 scalar ~ magnitude of mean(target)

    def fold(x):
        # (chunk_rows, 128) -> (chunk_rows//8, 8, 128) -> sum over leading
        # axis: pure VALU vreg adds, no cross-lane XLU work in the hot loop.
        return jnp.sum(x.reshape(chunk_rows // 8, 8, _LANES), axis=0)

    def body(c, carry):
        s_t, s_t2, s_res = carry
        r0 = pl.multiple_of(c * chunk_rows, chunk_rows)
        t = tgt_ref[pl.ds(r0, chunk_rows), :].astype(jnp.float32)
        o = pred_ref[pl.ds(r0, chunk_rows), :].astype(jnp.float32)
        d = t - o
        ts = t - pivot  # shifted target: keeps one-pass SS_tot stable
        return (s_t + fold(ts), s_t2 + fold(ts * ts), s_res + fold(d * d))

    zero = jnp.zeros((8, _LANES), jnp.float32)
    s_t, s_t2, s_res = jax.lax.fori_loop(
        0, n_chunks, body, (zero, zero, zero), unroll=(n_chunks <= 8))

    sum_t_ref[...] += s_t
    sum_t2_ref[...] += s_t2
    ss_res_ref[...] += s_res

    @pl.when(i == pl.num_programs(1) - 1)
    def _finalize():
        # Single cross-lane/sublane collapse per split, at the very end.
        part_ref[0, 0] = jnp.sum(sum_t_ref[...])
        part_ref[0, 1] = jnp.sum(sum_t2_ref[...])
        part_ref[0, 2] = jnp.sum(ss_res_ref[...])


def nse(output: jax.Array, target: jax.Array, basin: jax.Array | None = None) -> jax.Array:
    """Nash-Sutcliffe Efficiency.  `basin` is accepted for signature parity but
    unused by the reference forward pass."""
    del basin  # unused by the PyTorch module's forward
    assert output.shape == target.shape
    n_total = int(output.size)
    assert n_total > 0

    # Stream each input at its own dtype (bf16 stays bf16 -> half HBM traffic);
    # anything else is widened to f32 on the wire.
    def _stream(x):
        return x if x.dtype in (jnp.bfloat16, jnp.float32) else x.astype(jnp.float32)

    o_flat = _stream(output).reshape(-1)
    t_flat = _stream(target).reshape(-1)
    any_bf16 = (o_flat.dtype == jnp.bfloat16) or (t_flat.dtype == jnp.bfloat16)
    itemsize = 4 if (o_flat.dtype == jnp.float32 or t_flat.dtype == jnp.float32) else 2
    min_sub = 16 if any_bf16 else 8  # sublane alignment for the packed dtype

    # ---- Tiling: ~2 MiB blocks, <=2% padding, optional 2-way core split ----
    rows = _cdiv(n_total, _LANES)
    rows_a = _round_up(rows, min_sub)
    max_tile_rows = max(_BIG_CHUNK_ROWS, _TARGET_BLOCK_BYTES // (_LANES * itemsize))
    num_splits = 2 if rows_a >= _SPLIT_MIN_ROWS else 1
    num_tiles = _round_up(_cdiv(rows_a, max_tile_rows), num_splits)
    tile_raw = _cdiv(rows_a, num_tiles)
    chunk_rows = _BIG_CHUNK_ROWS if tile_raw >= 1024 else min_sub
    tile_r = _round_up(tile_raw, chunk_rows)
    padded_rows = tile_r * num_tiles
    tiles_per_split = num_tiles // num_splits
    n_chunks = tile_r // chunk_rows

    # ---- Pivot + padding ----
    # pivot: first target element rounded to the coarsest streamed dtype so it
    # is exactly representable in BOTH streams; padding both arrays with it
    # makes padded elements contribute exactly 0 to all three accumulators.
    pivot_dt = jnp.bfloat16 if any_bf16 else jnp.float32
    pivot = t_flat[:1].astype(pivot_dt).astype(jnp.float32)  # shape (1,)

    n_padded = padded_rows * _LANES
    if n_padded != n_total:
        # TODO(synk): zero-copy tail handling (1-D ragged BlockSpec + in-kernel
        # mask) would remove this extra HBM read+write pass for unaligned n.
        t_flat = jnp.pad(t_flat, (0, n_padded - n_total),
                         constant_values=pivot[0].astype(t_flat.dtype))
        o_flat = jnp.pad(o_flat, (0, n_padded - n_total),
                         constant_values=pivot[0].astype(o_flat.dtype))

    o2 = o_flat.reshape(padded_rows, _LANES)
    t2 = t_flat.reshape(padded_rows, _LANES)

    kernel = functools.partial(_nse_kernel, n_chunks=n_chunks, chunk_rows=chunk_rows)
    row_map = lambda s, i: (s * tiles_per_split + i, 0)

    parts = pl.pallas_call(
        kernel,
        out_shape=jax.ShapeDtypeStruct((num_splits, 3), jnp.float32),
        grid_spec=pltpu.PrefetchScalarGridSpec(
            num_scalar_prefetch=0,
            grid=(num_splits, tiles_per_split),
            in_specs=[
                pl.BlockSpec(memory_space=pltpu.SMEM),      # pivot scalar
                pl.BlockSpec((tile_r, _LANES), row_map),    # output / prediction
                pl.BlockSpec((tile_r, _LANES), row_map),    # target
            ],
            out_specs=pl.BlockSpec((1, 3), lambda s, i: (s, 0),
                                   memory_space=pltpu.SMEM),
            scratch_shapes=[
                pltpu.VMEM((8, _LANES), jnp.float32),   # sum(t - p)
                pltpu.VMEM((8, _LANES), jnp.float32),   # sum((t - p)^2)
                pltpu.VMEM((8, _LANES), jnp.float32),   # sum((t - o)^2)
            ],
        ),
        compiler_params=pltpu.CompilerParams(
            dimension_semantics=("parallel", "arbitrary"),
            vmem_limit_bytes=32 * 1024 * 1024,
        ),
    )(pivot, o2, t2)

    s_t = jnp.sum(parts[:, 0])
    s_t2 = jnp.sum(parts[:, 1])
    s_res = jnp.sum(parts[:, 2])
    # Shift-invariant identity: SS_tot = sum((t-p)^2) - (sum(t-p))^2 / n.
    ss_tot = s_t2 - (s_t * s_t) * jnp.float32(1.0 / n_total)
    return jnp.float32(1.0) - s_res / (ss_tot + jnp.float32(1e-10))


def _nse_ref(output, target):
    output = output.astype(jnp.float32)
    target = target.astype(jnp.float32)
    ss_res = jnp.sum(jnp.square(target - output))
    ss_tot = jnp.sum(jnp.square(target - jnp.mean(target)))
    return 1.0 - ss_res / (ss_tot + 1e-10)


if __name__ == "__main__":
    key = jax.random.PRNGKey(0)
    k1, k2, k3, k4, k5, k6, k7 = jax.random.split(key, 7)

    # Primary check: small NCHW-shaped inputs (batch=2, channels=4, 16x16).
    output = jax.random.normal(k1, (2, 4, 16, 16), dtype=jnp.float32)
    target = jax.random.normal(k2, (2, 4, 16, 16), dtype=jnp.float32)
    basin = jax.random.randint(k3, (2,), 0, 10)  # unused by the metric

    result = nse(output, target, basin)
    jax.block_until_ready(result)
    ref = _nse_ref(output, target)
    assert jnp.allclose(result, ref, rtol=1e-5, atol=1e-5), (result, ref)

    # Secondary check: exercises the 2-split grid, the ragged-size pivot
    # padding path, and the multi-chunk inner loop.
    out2 = jax.random.normal(k4, (2, 3, 150, 151), dtype=jnp.float32)
    tgt2 = 0.5 * jax.random.normal(k5, (2, 3, 150, 151), dtype=jnp.float32) + 0.1
    result2 = nse(out2, tgt2, basin)
    jax.block_until_ready(result2)
    ref2 = _nse_ref(out2, tgt2)
    assert jnp.allclose(result2, ref2, rtol=1e-4, atol=1e-4), (result2, ref2)

    # Numerical-stability check: large mean, small variance (|mean| >> std),
    # the regime where a naive one-pass SS_tot would cancel catastrophically.
    tgt3 = 500.0 + jax.random.normal(k6, (8, 4096), dtype=jnp.float32)
    out3 = tgt3 + 0.1 * jax.random.normal(k7, (8, 4096), dtype=jnp.float32)
    result3 = nse(out3, tgt3, basin)
    jax.block_until_ready(result3)
    ref3 = _nse_ref(out3, tgt3)
    assert jnp.allclose(result3, ref3, rtol=1e-3, atol=1e-3), (result3, ref3)

    print("KERNEL_OK")
</pallas_src>

<mosaic_0001>
module attributes {stable_mosaic.version = 11 : i64} {
  func.func @_nse_kernel(%arg0: i32, %arg1: i32, %arg2: memref<1xf32, #tpu.memory_space<smem>>, %arg3: memref<16x128xf32, #tpu.memory_space<vmem>>, %arg4: memref<16x128xf32, #tpu.memory_space<vmem>>, %arg5: memref<1x3xf32, #tpu.memory_space<smem>>, %arg6: memref<8x128xf32, #tpu.memory_space<vmem>>, %arg7: memref<8x128xf32, #tpu.memory_space<vmem>>, %arg8: memref<8x128xf32, #tpu.memory_space<vmem>>) attributes {dimension_semantics = [#tpu.dimension_semantics<parallel>, #tpu.dimension_semantics<arbitrary>], iteration_bounds = array<i64: 1, 1>, scalar_prefetch = 0 : i64, scratch_operands = 3 : i64, tpu.core_type = #tpu.core_type<tc>, window_params = [{transform_indices = @transform_0, window_bounds = array<i64: 1>}, {transform_indices = @transform_1, window_bounds = array<i64: 16, 128>}, {transform_indices = @transform_2, window_bounds = array<i64: 16, 128>}, {transform_indices = @transform_3, window_bounds = array<i64: 1, 3>}]} {
    %c0_i32 = arith.constant 0 : i32
    %0 = arith.cmpi eq, %arg1, %c0_i32 : i32
    %1 = arith.extui %0 : i1 to i32
    %c0_i32_0 = arith.constant 0 : i32
    %2 = arith.cmpi ne, %1, %c0_i32_0 : i32
    scf.if %2 {
      %cst_27 = arith.constant 0.000000e+00 : f32
      %57 = vector.broadcast %cst_27 : f32 to vector<8x128xf32>
      %c0_28 = arith.constant 0 : index
      %c0_29 = arith.constant 0 : index
      %58 = vector.load %arg6[%c0_28, %c0_29] : memref<8x128xf32, #tpu.memory_space<vmem>>, vector<8x128xf32>
      tpu.vector_store %arg6[%c0_28, %c0_29], %57 {strides = array<i32>} : memref<8x128xf32, #tpu.memory_space<vmem>>, vector<8x128xf32>,
      %cst_30 = arith.constant 0.000000e+00 : f32
      %59 = vector.broadcast %cst_30 : f32 to vector<8x128xf32>
      %c0_31 = arith.constant 0 : index
      %c0_32 = arith.constant 0 : index
      %60 = vector.load %arg7[%c0_31, %c0_32] : memref<8x128xf32, #tpu.memory_space<vmem>>, vector<8x128xf32>
      tpu.vector_store %arg7[%c0_31, %c0_32], %59 {strides = array<i32>} : memref<8x128xf32, #tpu.memory_space<vmem>>, vector<8x128xf32>,
      %cst_33 = arith.constant 0.000000e+00 : f32
      %61 = vector.broadcast %cst_33 : f32 to vector<8x128xf32>
      %c0_34 = arith.constant 0 : index
      %c0_35 = arith.constant 0 : index
      %62 = vector.load %arg8[%c0_34, %c0_35] : memref<8x128xf32, #tpu.memory_space<vmem>>, vector<8x128xf32>
      tpu.vector_store %arg8[%c0_34, %c0_35], %61 {strides = array<i32>} : memref<8x128xf32, #tpu.memory_space<vmem>>, vector<8x128xf32>,
    } else {
    }
    %c0 = arith.constant 0 : index
    %3 = memref.load %arg2[%c0] : memref<1xf32, #tpu.memory_space<smem>>
    %cst = arith.constant 0.000000e+00 : f32
    %4 = vector.broadcast %cst : f32 to vector<8x128xf32>
    %c0_i32_1 = arith.constant 0 : i32
    %c8_i32 = arith.constant 8 : i32
    %5 = arith.muli %c0_i32_1, %c8_i32 : i32
    %6 = tpu.assume_multiple %5, 8 : i32
    %7 = arith.index_cast %6 : i32 to index
    %c0_2 = arith.constant 0 : index
    %8 = vector.load %arg4[%7, %c0_2] : memref<16x128xf32, #tpu.memory_space<vmem>>, vector<8x128xf32>
    %9 = arith.index_cast %6 : i32 to index
    %c0_3 = arith.constant 0 : index
    %10 = vector.load %arg3[%9, %c0_3] : memref<16x128xf32, #tpu.memory_space<vmem>>, vector<8x128xf32>
    %11 = arith.subf %8, %10 : vector<8x128xf32>
    %12 = vector.broadcast %3 : f32 to vector<8x128xf32>
    %13 = arith.subf %8, %12 : vector<8x128xf32>
    %14 = vector.shape_cast %13 : vector<8x128xf32> to vector<1x8x128xf32>
    %cst_4 = arith.constant dense<0.000000e+00> : vector<8x128xf32>
    %15 = vector.multi_reduction <add>, %14, %cst_4 [0] : vector<1x8x128xf32> to vector<8x128xf32>
    %16 = arith.addf %4, %15 : vector<8x128xf32>
    %17 = arith.mulf %13, %13 : vector<8x128xf32>
    %18 = vector.shape_cast %17 : vector<8x128xf32> to vector<1x8x128xf32>
    %cst_5 = arith.constant dense<0.000000e+00> : vector<8x128xf32>
    %19 = vector.multi_reduction <add>, %18, %cst_5 [0] : vector<1x8x128xf32> to vector<8x128xf32>
    %20 = arith.addf %4, %19 : vector<8x128xf32>
    %21 = arith.mulf %11, %11 : vector<8x128xf32>
    %22 = vector.shape_cast %21 : vector<8x128xf32> to vector<1x8x128xf32>
    %cst_6 = arith.constant dense<0.000000e+00> : vector<8x128xf32>
    %23 = vector.multi_reduction <add>, %22, %cst_6 [0] : vector<1x8x128xf32> to vector<8x128xf32>
    %24 = arith.addf %4, %23 : vector<8x128xf32>
    %c1_i32 = arith.constant 1 : i32
    %c8_i32_7 = arith.constant 8 : i32
    %25 = arith.muli %c1_i32, %c8_i32_7 : i32
    %26 = tpu.assume_multiple %25, 8 : i32
    %27 = arith.index_cast %26 : i32 to index
    %c0_8 = arith.constant 0 : index
    %28 = vector.load %arg4[%27, %c0_8] : memref<16x128xf32, #tpu.memory_space<vmem>>, vector<8x128xf32>
    %29 = arith.index_cast %26 : i32 to index
    %c0_9 = arith.constant 0 : index
    %30 = vector.load %arg3[%29, %c0_9] : memref<16x128xf32, #tpu.memory_space<vmem>>, vector<8x128xf32>
    %31 = arith.subf %28, %30 : vector<8x128xf32>
    %32 = vector.broadcast %3 : f32 to vector<8x128xf32>
    %33 = arith.subf %28, %32 : vector<8x128xf32>
    %34 = vector.shape_cast %33 : vector<8x128xf32> to vector<1x8x128xf32>
    %cst_10 = arith.constant dense<0.000000e+00> : vector<8x128xf32>
    %35 = vector.multi_reduction <add>, %34, %cst_10 [0] : vector<1x8x128xf32> to vector<8x128xf32>
    %36 = arith.addf %16, %35 : vector<8x128xf32>
    %37 = arith.mulf %33, %33 : vector<8x128xf32>
    %38 = vector.shape_cast %37 : vector<8x128xf32> to vector<1x8x128xf32>
    %cst_11 = arith.constant dense<0.000000e+00> : vector<8x128xf32>
    %39 = vector.multi_reduction <add>, %38, %cst_11 [0] : vector<1x8x128xf32> to vector<8x128xf32>
    %40 = arith.addf %20, %39 : vector<8x128xf32>
    %41 = arith.mulf %31, %31 : vector<8x128xf32>
    %42 = vector.shape_cast %41 : vector<8x128xf32> to vector<1x8x128xf32>
    %cst_12 = arith.constant dense<0.000000e+00> : vector<8x128xf32>
    %43 = vector.multi_reduction <add>, %42, %cst_12 [0] : vector<1x8x128xf32> to vector<8x128xf32>
    %44 = arith.addf %24, %43 : vector<8x128xf32>
    %c2_i32 = arith.constant 2 : i32
    %c0_13 = arith.constant 0 : index
    %c0_14 = arith.constant 0 : index
    %45 = vector.load %arg6[%c0_13, %c0_14] : memref<8x128xf32, #tpu.memory_space<vmem>>, vector<8x128xf32>
    %46 = arith.addf %45, %36 : vector<8x128xf32>
    %c0_15 = arith.constant 0 : index
    %c0_16 = arith.constant 0 : index
    %47 = vector.load %arg6[%c0_15, %c0_16] : memref<8x128xf32, #tpu.memory_space<vmem>>, vector<8x128xf32>
    tpu.vector_store %arg6[%c0_15, %c0_16], %46 {strides = array<i32>} : memref<8x128xf32, #tpu.memory_space<vmem>>, vector<8x128xf32>,
    %c0_17 = arith.constant 0 : index
    %c0_18 = arith.constant 0 : index
    %48 = vector.load %arg7[%c0_17, %c0_18] : memref<8x128xf32, #tpu.memory_space<vmem>>, vector<8x128xf32>
    %49 = arith.addf %48, %40 : vector<8x128xf32>
    %c0_19 = arith.constant 0 : index
    %c0_20 = arith.constant 0 : index
    %50 = vector.load %arg7[%c0_19, %c0_20] : memref<8x128xf32, #tpu.memory_space<vmem>>, vector<8x128xf32>
    tpu.vector_store %arg7[%c0_19, %c0_20], %49 {strides = array<i32>} : memref<8x128xf32, #tpu.memory_space<vmem>>, vector<8x128xf32>,
    %c0_21 = arith.constant 0 : index
    %c0_22 = arith.constant 0 : index
    %51 = vector.load %arg8[%c0_21, %c0_22] : memref<8x128xf32, #tpu.memory_space<vmem>>, vector<8x128xf32>
    %52 = arith.addf %51, %44 : vector<8x128xf32>
    %c0_23 = arith.constant 0 : index
    %c0_24 = arith.constant 0 : index
    %53 = vector.load %arg8[%c0_23, %c0_24] : memref<8x128xf32, #tpu.memory_space<vmem>>, vector<8x128xf32>
    tpu.vector_store %arg8[%c0_23, %c0_24], %52 {strides = array<i32>} : memref<8x128xf32, #tpu.memory_space<vmem>>, vector<8x128xf32>,
    %c0_i32_25 = arith.constant 0 : i32
    %54 = arith.cmpi eq, %arg1, %c0_i32_25 : i32
    %55 = arith.extui %54 : i1 to i32
    %c0_i32_26 = arith.constant 0 : i32
    %56 = arith.cmpi ne, %55, %c0_i32_26 : i32
    scf.if %56 {
      %c0_27 = arith.constant 0 : index
      %c0_28 = arith.constant 0 : index
      %57 = vector.load %arg6[%c0_27, %c0_28] : memref<8x128xf32, #tpu.memory_space<vmem>>, vector<8x128xf32>
      %58 = vector.shape_cast %57 : vector<8x128xf32> to vector<1x8x128xf32>
      %cst_29 = arith.constant dense<0.000000e+00> : vector<1xf32>
      %59 = vector.multi_reduction <add>, %58, %cst_29 [1, 2] : vector<1x8x128xf32> to vector<1xf32>
      %60 = vector.shape_cast %59 : vector<1xf32> to vector<1x1x1xf32>
      %61 = vector.extract %60[0, 0, 0] : f32 from vector<1x1x1xf32>
      %c0_30 = arith.constant 0 : index
      %c0_31 = arith.constant 0 : index
      %62 = memref.load %arg5[%c0_30, %c0_31] : memref<1x3xf32, #tpu.memory_space<smem>>
      memref.store %61, %arg5[%c0_30, %c0_31] : memref<1x3xf32, #tpu.memory_space<smem>>
      %c0_32 = arith.constant 0 : index
      %c0_33 = arith.constant 0 : index
      %63 = vector.load %arg7[%c0_32, %c0_33] : memref<8x128xf32, #tpu.memory_space<vmem>>, vector<8x128xf32>
      %64 = vector.shape_cast %63 : vector<8x128xf32> to vector<1x8x128xf32>
      %cst_34 = arith.constant dense<0.000000e+00> : vector<1xf32>
      %65 = vector.multi_reduction <add>, %64, %cst_34 [1, 2] : vector<1x8x128xf32> to vector<1xf32>
      %66 = vector.shape_cast %65 : vector<1xf32> to vector<1x1x1xf32>
      %67 = vector.extract %66[0, 0, 0] : f32 from vector<1x1x1xf32>
      %c0_35 = arith.constant 0 : index
      %c1 = arith.constant 1 : index
      %68 = memref.load %arg5[%c0_35, %c1] : memref<1x3xf32, #tpu.memory_space<smem>>
      memref.store %67, %arg5[%c0_35, %c1] : memref<1x3xf32, #tpu.memory_space<smem>>
      %c0_36 = arith.constant 0 : index
      %c0_37 = arith.constant 0 : index
      %69 = vector.load %arg8[%c0_36, %c0_37] : memref<8x128xf32, #tpu.memory_space<vmem>>, vector<8x128xf32>
      %70 = vector.shape_cast %69 : vector<8x128xf32> to vector<1x8x128xf32>
      %cst_38 = arith.constant dense<0.000000e+00> : vector<1xf32>
      %71 = vector.multi_reduction <add>, %70, %cst_38 [1, 2] : vector<1x8x128xf32> to vector<1xf32>
      %72 = vector.shape_cast %71 : vector<1xf32> to vector<1x1x1xf32>
      %73 = vector.extract %72[0, 0, 0] : f32 from vector<1x1x1xf32>
      %c0_39 = arith.constant 0 : index
      %c2 = arith.constant 2 : index
      %74 = memref.load %arg5[%c0_39, %c2] : memref<1x3xf32, #tpu.memory_space<smem>>
      memref.store %73, %arg5[%c0_39, %c2] : memref<1x3xf32, #tpu.memory_space<smem>>
    } else {
    }
    return
  }
  func.func @transform_0(%arg0: i32, %arg1: i32) -> i32 {
    %c0_i32 = arith.constant 0 : i32
    %c0_i32_0 = arith.constant 0 : i32
    return %c0_i32 : i32
  }
  func.func @transform_1(%arg0: i32, %arg1: i32) -> (i32, i32) {
    %c1_i32 = arith.constant 1 : i32
    %0 = arith.muli %arg0, %c1_i32 : i32
    %1 = arith.addi %0, %arg1 : i32
    %c0_i32 = arith.constant 0 : i32
    %c0_i32_0 = arith.constant 0 : i32
    return %1, %c0_i32 : i32, i32
  }
  func.func @transform_2(%arg0: i32, %arg1: i32) -> (i32, i32) {
    %c1_i32 = arith.constant 1 : i32
    %0 = arith.muli %arg0, %c1_i32 : i32
    %1 = arith.addi %0, %arg1 : i32
    %c0_i32 = arith.constant 0 : i32
    %c0_i32_0 = arith.constant 0 : i32
    return %1, %c0_i32 : i32, i32
  }
  func.func @transform_3(%arg0: i32, %arg1: i32) -> (i32, i32) {
    %c0_i32 = arith.constant 0 : i32
    %c0_i32_0 = arith.constant 0 : i32
    return %arg0, %c0_i32 : i32, i32
  }
}

</mosaic_0001>

<llo_original>
// kernel: tpu_custom_call.1
$region0: #{tpu_custom_call.1}
  #allocation0 [shape = 'u32[]', space=smem, size = 0x4, offset = 0x4, fixed_abs, tag = 'smem constant byte address 0x4 - core index']
  #allocation1 [shape = 'u32[72,128]{1,0:T(1,128)}', space=vmem, size = 0x9000, scoped, tag = 'internal scratch']
  #allocation2 [shape = 'f32[8,128]{1,0:T(8,128)}', space=vmem, size = 0x1000, scoped, tag = 'scratch operand']
  #allocation3 [shape = 'f32[8,128]{1,0:T(8,128)}', space=vmem, size = 0x1000, scoped, tag = 'scratch operand']
  #allocation4 [shape = 'f32[8,128]{1,0:T(8,128)}', space=vmem, size = 0x1000, scoped, tag = 'scratch operand']
  #allocation5 [shape = 'f32[1]{0:T(128)S(6)}', space=smem, size = 0x200, scoped, tag = 'scoped memory for tpu_custom_call.1']
  %s0 = inlined_call_operand.<no memory space> [shape: f32[1], index: 0, kind: input, shape index: {}]
  %s1 = inlined_call_operand.hbm [shape: f32[16,128], index: 1, kind: input, shape index: {}]
  %s2 = inlined_call_operand.hbm [shape: f32[16,128], index: 2, kind: input, shape index: {}]
  %s3 = inlined_call_operand.hbm [shape: f32[1,3], index: 3, kind: output, shape index: {}]
  %s4 = sld [smem:[#allocation0]]
  $region38: #{tpu_custom_call.1} parent=0
    _
  %s6 = ssub.s32 1, %s4
  %s7 = scalar_select 0, %s6, %s4
  %8 = sst [smem:[#allocation5]] %s0
  $region1: #{tpu_custom_call.1} parent=0
    #allocation6 [shape = 'u8[8192]{0}', space=vmem, size = 0x2000, scoped, tag = 'input window, operand 1, single buffered']
    #allocation7 [shape = 's32[1]{0}', space=sflag, size = 0x4, scoped, tag = 'scoped memory for tpu_custom_call.1']
    #allocation8 [shape = 's32[1]{0}', space=sflag, size = 0x4, scoped, tag = 'scoped memory for tpu_custom_call.1']
    #allocation9 [shape = 'u8[8192]{0}', space=vmem, size = 0x2000, scoped, tag = 'input window, operand 2, single buffered']
    #allocation10 [shape = 's32[1]{0}', space=sflag, size = 0x4, scoped, tag = 'scoped memory for tpu_custom_call.1']
    #allocation11 [shape = 'u8[512]{0}', space=smem, size = 0x200, scoped, tag = 'output window, operand 0, single buffered']
    %9 = vsyncpa [#allocation7], 0
    %10 = vsyncpa [#allocation10], 0
    %11 = vsyncpa [#allocation8], 0
    // Predicated region
    $region2: #{tpu_custom_call.1} parent=1 // pred_check
      _
    $region3: #{tpu_custom_call.1} parent=1 // pred_check_branch
      %13 = sbr.rel (0) target = $region5
    $region4: #{tpu_custom_call.1} parent=1 // pred_region
      _
    $region5: #{tpu_custom_call.1} parent=1 // pred_fallthru
      _
    // Predicated region
    $region6: #{tpu_custom_call.1} parent=1 // pred_check
      _
    $region7: #{tpu_custom_call.1} parent=1 // pred_check_branch
      %15 = sbr.rel (0) target = $region9
    $region8: #{tpu_custom_call.1} parent=1 // pred_region
      %s16 = sadd.s32 0, 0
      %s17 = smul.u32 2, %s16
      %19 = vsyncadd [#allocation7], 0
      %s20 = smul.addr %s17, 8
      %s21 = scalar_lea.hbm %s1, %s20
      %s22 = sshll.u32 %s21, 4
      %s23 = int_to_ptr.hbm [resolvable:$true] %s22
      %s24 = sshll.u32 [#allocation6], 4
      %s25 = int_to_ptr.vmem [resolvable:$true] %s24
      %30 = dma.hbm_to_vmem [thread:$0]  %s23, 256, %s25, [#allocation7], 128, 128, 8
    $region9: #{tpu_custom_call.1} parent=1 // pred_fallthru
      _
    // Predicated region
    $region10: #{tpu_custom_call.1} parent=1 // pred_check
      _
    $region11: #{tpu_custom_call.1} parent=1 // pred_check_branch
      %32 = sbr.rel (0) target = $region13
    $region12: #{tpu_custom_call.1} parent=1 // pred_region
      %s33 = sadd.s32 0, 0
      %s34 = smul.u32 2, %s33
      %36 = vsyncadd [#allocation10], 0
      %s37 = smul.addr %s34, 8
      %s38 = scalar_lea.hbm %s2, %s37
      %s39 = sshll.u32 %s38, 4
      %s40 = int_to_ptr.hbm [resolvable:$true] %s39
      %s41 = sshll.u32 [#allocation9], 4
      %s42 = int_to_ptr.vmem [resolvable:$true] %s41
      %47 = dma.hbm_to_vmem [thread:$0]  %s40, 256, %s42, [#allocation10], 128, 128, 8
    $region13: #{tpu_custom_call.1} parent=1 // pred_fallthru
      _
    // Predicated region
    $region14: #{tpu_custom_call.1} parent=1 // pred_check
      _
    $region15: #{tpu_custom_call.1} parent=1 // pred_check_branch
      %49 = sbr.rel (0) target = $region17
    $region16: #{tpu_custom_call.1} parent=1 // pred_region
      %51 = dma.done [#allocation7], 256
    $region17: #{tpu_custom_call.1} parent=1 // pred_fallthru
      _
    // Predicated region
    $region18: #{tpu_custom_call.1} parent=1 // pred_check
      _
    $region19: #{tpu_custom_call.1} parent=1 // pred_check_branch
      %53 = sbr.rel (0) target = $region21
    $region20: #{tpu_custom_call.1} parent=1 // pred_region
      %55 = dma.done [#allocation10], 256
    $region21: #{tpu_custom_call.1} parent=1 // pred_fallthru
      _
    %s56 = sadd.s32 0, 0
    %s57 = smul.u32 2, %s56
    %s58 = sadd.s32 0, 0
    %s59 = smul.u32 2, %s58
    %p60 = scmp.eq.s32.totalorder 0, 0
    // Predicated region
    $region22: #{tpu_custom_call.1} parent=1 // pred_check
      %p61 = pneg %p60
    $region23: #{tpu_custom_call.1} parent=1 // pred_check_branch
      %63 = sbr.rel (%p61) target = $region25
    $region24: #{tpu_custom_call.1} parent=1 // pred_region
      %64 = vst [vmem:[#allocation2] sm:$0xff] 0.0
      %65 = vst [vmem:[#allocation3] sm:$0xff] 0.0
      %66 = vst [vmem:[#allocation4] sm:$0xff] 0.0
    $region25: #{tpu_custom_call.1} parent=1 // pred_fallthru
      _
    %s67 = sld [smem:[#allocation5]]
    %v68 = vld [vmem:[#allocation9] sm:$0xff]
    %v69 = vld [vmem:[#allocation6] sm:$0xff]
    %v70 = vsub.f32 %v68, %v69
    %v71 = vstv %s67
    %v72 = vsub.f32 %v68, %v71
    %v73 = vadd.f32 %v72, 0.0
    %v74 = vadd.f32 %v73, 0.0
    %v75 = vmul.f32 %v72, %v72
    %v76 = vadd.f32 %v75, 0.0
    %v77 = vadd.f32 %v76, 0.0
    %v78 = vmul.f32 %v70, %v70
    %v79 = vadd.f32 %v78, 0.0
    %v80 = vadd.f32 %v79, 0.0
    %s81 = scalar_lea.vmem [#allocation9], 8
    %v82 = vld [vmem:[%s81] sm:$0xff]
    %s83 = scalar_lea.vmem [#allocation6], 8
    %v84 = vld [vmem:[%s83] sm:$0xff]
    %v85 = vsub.f32 %v82, %v84
    %v86 = vsub.f32 %v82, %v71
    %v87 = vadd.f32 %v86, 0.0
    %v88 = vadd.f32 %v74, %v87
    %v89 = vmul.f32 %v86, %v86
    %v90 = vadd.f32 %v89, 0.0
    %v91 = vadd.f32 %v77, %v90
    %v92 = vmul.f32 %v85, %v85
    %v93 = vadd.f32 %v92, 0.0
    %v94 = vadd.f32 %v80, %v93
    %v95 = vld [vmem:[#allocation2] sm:$0xff]
    %v96 = vadd.f32 %v95, %v88
    %97 = vst [vmem:[#allocation2] sm:$0xff] %v96
    %v98 = vld [vmem:[#allocation3] sm:$0xff]
    %v99 = vadd.f32 %v98, %v91
    %100 = vst [vmem:[#allocation3] sm:$0xff] %v99
    %v101 = vld [vmem:[#allocation4] sm:$0xff]
    %v102 = vadd.f32 %v101, %v94
    %103 = vst [vmem:[#allocation4] sm:$0xff] %v102
    // Predicated region
    $region26: #{tpu_custom_call.1} parent=1 // pred_check
      %p104 = pneg %p60
    $region27: #{tpu_custom_call.1} parent=1 // pred_check_branch
      %106 = sbr.rel (%p104) target = $region29
    $region28: #{tpu_custom_call.1} parent=1 // pred_region
      %v107 = vld [vmem:[#allocation2] sm:$0xff]
      %108 = vadd.xlane.f32.xlu0 %v107
      %v109 = vpop.xlane.xlu0 %108
      %v110 = vrot.slane %v109, 4
      %v111 = vadd.f32 %v109, %v110
      %v112 = vrot.slane %v111, 2
      %v113 = vadd.f32 %v111, %v112
      %v114 = vrot.slane %v113, 1
      %v115 = vadd.f32 %v113, %v114
      %s116 = vtos %v115
      %s117 = scalar_lea.smem [#allocation11], 0
      %118 = sst [smem:[%s117]] %s116
      %v119 = vld [vmem:[#allocation3] sm:$0xff]
      %120 = vadd.xlane.f32.xlu0 %v119
      %v121 = vpop.xlane.xlu0 %120
      %v122 = vrot.slane %v121, 4
      %v123 = vadd.f32 %v121, %v122
      %v124 = vrot.slane %v123, 2
      %v125 = vadd.f32 %v123, %v124
      %v126 = vrot.slane %v125, 1
      %v127 = vadd.f32 %v125, %v126
      %s128 = vtos %v127
      %s129 = scalar_lea.smem [#allocation11], 1
      %130 = sst [smem:[%s129]] %s128
      %v131 = vld [vmem:[#allocation4] sm:$0xff]
      %132 = vadd.xlane.f32.xlu0 %v131
      %v133 = vpop.xlane.xlu0 %132
      %v134 = vrot.slane %v133, 4
      %v135 = vadd.f32 %v133, %v134
      %v136 = vrot.slane %v135, 2
      %v137 = vadd.f32 %v135, %v136
      %v138 = vrot.slane %v137, 1
      %v139 = vadd.f32 %v137, %v138
      %s140 = vtos %v139
      %s141 = scalar_lea.smem [#allocation11], 2
      %142 = sst [smem:[%s141]] %s140
    $region29: #{tpu_custom_call.1} parent=1 // pred_fallthru
      _
    // Predicated region
    $region30: #{tpu_custom_call.1} parent=1 // pred_check
      _
    $region31: #{tpu_custom_call.1} parent=1 // pred_check_branch
      %144 = sbr.rel (0) target = $region33
    $region32: #{tpu_custom_call.1} parent=1 // pred_region
      %146 = vsyncadd [#allocation8], 0
      %s148 = sshll.u32 %s3, 4
      %s149 = int_to_ptr.hbm [resolvable:$true] %s148
      %151 = dma.smem_to_hbm [#allocation11], 16, %s149, [#allocation8]
    $region33: #{tpu_custom_call.1} parent=1 // pred_fallthru
      _
    // Predicated region
    $region34: #{tpu_custom_call.1} parent=1 // pred_check
      _
    $region35: #{tpu_custom_call.1} parent=1 // pred_check_branch
      %153 = sbr.rel (0) target = $region37
    $region36: #{tpu_custom_call.1} parent=1 // pred_region
      %155 = dma.done [#allocation8], 16
    $region37: #{tpu_custom_call.1} parent=1 // pred_fallthru
      _
    %156 = sfence
    %157 = vsyncpa [#allocation7], 1
    %158 = vsyncpa [#allocation10], 1
    %159 = vsyncpa [#allocation8], 1

</llo_original>
